<compile_context>
chip_gen: v5e
topology: v5e:2x2
jax: 0.10.0
libtpu: 0.0.40
codegen_flags: <defaults>
</compile_context>

<pallas_src>
import functools
import math

import jax
import jax.numpy as jnp
import numpy as np
from jax import lax
from jax.experimental import pallas as pl
from jax.experimental.pallas import tpu as pltpu


def _round_up(x, m):
    return ((x + m - 1) // m) * m


# --------------------------------------------------------------------------
# Pallas kernel: fused SDDMM + masked exp + SpMM(V) + SpMM(ones) + normalize
# --------------------------------------------------------------------------
def _graph_attention_kernel(blist_ref, bcount_ref,          # scalar prefetch (SMEM)
                            q_ref, k_ref, v_ref, mask_ref,  # inputs (VMEM tiles)
                            o_ref,                          # output (VMEM tile)
                            wv_acc, z_acc,                  # scratch (VMEM, f32)
                            *, inv_scale):
    i = pl.program_id(0)    # destination-node tile
    kk = pl.program_id(1)   # position in this tile's nonzero src-block list

    @pl.when(kk == 0)
    def _init():
        wv_acc[...] = jnp.zeros_like(wv_acc)
        z_acc[...] = jnp.zeros_like(z_acc)

    # Skip padded (empty) src blocks entirely.
    @pl.when(kk < bcount_ref[i])
    def _compute():
        q = q_ref[...]          # (TM, Dp) bf16
        k = k_ref[...]          # (TK, Dp) bf16
        v = v_ref[...]          # (TK, Dp) bf16
        m = mask_ref[...]       # (TM, TK) int8  (mask[dst, src])

        # SDDMM: contract feature dim of q with feature dim of k (no k.T copy).
        s = lax.dot_general(q, k, (((1,), (1,)), ((), ())),
                            preferred_element_type=jnp.float32)
        s = jnp.clip(s * inv_scale, -5.0, 5.0)
        p = jnp.where(m != 0, jnp.exp(s), 0.0)                      # f32

        z_acc[...] += jnp.sum(p, axis=-1, keepdims=True)            # SpMM(ones)
        wv_acc[...] += jnp.dot(p.astype(v.dtype), v,                # SpMM(V)
                               preferred_element_type=jnp.float32)

    @pl.when(kk == pl.num_programs(1) - 1)
    def _finalize():
        # Matches reference semantics: isolated dst nodes (z == 0) yield inf/nan.
        o_ref[...] = (wv_acc[...] * pl.reciprocal(z_acc[...], approx=True)
                      ).astype(o_ref.dtype)


# --------------------------------------------------------------------------
# Host-side block-sparse metadata (analogue of FlashSparse's inputInfo preproc)
# --------------------------------------------------------------------------
def build_block_sparse_meta(mask_bool_np, tile_m, tile_k):
    pad_n = mask_bool_np.shape[0]
    num_i = pad_n // tile_m
    num_k = pad_n // tile_k
    blk = mask_bool_np.reshape(num_i, tile_m, num_k, tile_k).any(axis=(1, 3))
    counts = blk.sum(axis=1).astype(np.int32)
    max_blocks = max(1, int(counts.max()))
    block_list = np.zeros((num_i, max_blocks), dtype=np.int32)
    for i in range(num_i):
        nz = np.nonzero(blk[i])[0].astype(np.int32)
        if nz.size:
            block_list[i, :nz.size] = nz
            # Clamp padding entries to the last valid block so the skipped grid
            # steps map to the SAME block -> no extra DMA is issued.
            block_list[i, nz.size:] = nz[-1]
    return block_list, counts, max_blocks


# --------------------------------------------------------------------------
# Wrapper around pallas_call
# --------------------------------------------------------------------------
def graph_attention_pallas(q_h, k_h, v_h, mask, out_dim, *,
                           tile_m=128, tile_k=128):
    """q_h, k_h, v_h: [N, D] floats; mask: [N, N] (dst, src), nonzero == edge."""
    N, D = q_h.shape
    pad_n = _round_up(N, math.lcm(tile_m, tile_k))
    pad_d = _round_up(D, 128)                      # lane-dense feature dim
    inv_scale = 1.0 / math.sqrt(float(out_dim))

    q = jnp.pad(q_h.astype(jnp.bfloat16), ((0, pad_n - N), (0, pad_d - D)))
    k = jnp.pad(k_h.astype(jnp.bfloat16), ((0, pad_n - N), (0, pad_d - D)))
    v = jnp.pad(v_h.astype(jnp.bfloat16), ((0, pad_n - N), (0, pad_d - D)))

    mask_np = np.asarray(mask) != 0
    mask_i8 = np.zeros((pad_n, pad_n), dtype=np.int8)
    mask_i8[:N, :N] = mask_np.astype(np.int8)

    block_list, counts, max_blocks = build_block_sparse_meta(
        mask_i8 != 0, tile_m, tile_k)

    num_i = pad_n // tile_m
    kernel = functools.partial(_graph_attention_kernel, inv_scale=inv_scale)

    out = pl.pallas_call(
        kernel,
        out_shape=jax.ShapeDtypeStruct((pad_n, pad_d), jnp.bfloat16),
        grid_spec=pltpu.PrefetchScalarGridSpec(
            num_scalar_prefetch=2,
            grid=(num_i, max_blocks),
            in_specs=[
                # Q tile for this dst-node block.
                pl.BlockSpec((tile_m, pad_d), lambda i, k, bl, bc: (i, 0)),
                # K / V src blocks chosen via the prefetched block list.
                pl.BlockSpec((tile_k, pad_d), lambda i, k, bl, bc: (bl[i, k], 0)),
                pl.BlockSpec((tile_k, pad_d), lambda i, k, bl, bc: (bl[i, k], 0)),
                # int8 adjacency mask tile (dst, src).
                pl.BlockSpec((tile_m, tile_k), lambda i, k, bl, bc: (i, bl[i, k])),
            ],
            out_specs=pl.BlockSpec((tile_m, pad_d), lambda i, k, bl, bc: (i, 0)),
            scratch_shapes=[
                pltpu.VMEM((tile_m, pad_d), jnp.float32),   # wV accumulator
                pltpu.VMEM((tile_m, 1), jnp.float32),       # z accumulator
            ],
        ),
        compiler_params=pltpu.CompilerParams(
            dimension_semantics=("parallel", "arbitrary"),
            vmem_limit_bytes=48 * 1024 * 1024,
        ),
    )(jnp.asarray(block_list), jnp.asarray(counts), q, k, v,
      jnp.asarray(mask_i8))

    return out[:N, :D]


# --------------------------------------------------------------------------
# Module wrapper: parameters + projections (plain-JAX glue, bf16 on TPU MXU)
# --------------------------------------------------------------------------
def init_params(key, in_dim, out_dim, num_heads, use_bias):
    d_out = out_dim * num_heads
    keys = jax.random.split(key, 6)
    bound = 1.0 / math.sqrt(in_dim)

    def lin(kw, kb):
        w = jax.random.uniform(kw, (d_out, in_dim), jnp.float32, -bound, bound)
        b = (jax.random.uniform(kb, (d_out,), jnp.float32, -bound, bound)
             if use_bias else None)
        return w.astype(jnp.float16), (None if b is None else b.astype(jnp.float16))

    return {"Q": lin(keys[0], keys[1]),
            "K": lin(keys[2], keys[3]),
            "V": lin(keys[4], keys[5])}


def _linear_bf16(x, wb):
    w, b = wb
    y = jnp.dot(x.astype(jnp.bfloat16), w.T.astype(jnp.bfloat16))
    if b is not None:
        y = y + b.astype(jnp.bfloat16)
    return y.astype(jnp.bfloat16)


def project_qkv(params, h):
    hb = h.astype(jnp.bfloat16)
    return (_linear_bf16(hb, params["Q"]),
            _linear_bf16(hb, params["K"]),
            _linear_bf16(hb, params["V"]))


def multi_head_attention_flash_sparse_forward(params, mask, h, out_dim):
    """Forward pass; returns [N, num_heads*out_dim] float16."""
    q_h, k_h, v_h = project_qkv(params, h)
    out = graph_attention_pallas(q_h, k_h, v_h, mask, out_dim)
    return out.astype(jnp.float16)


# --------------------------------------------------------------------------
# Pure-JAX reference (same projections, f32 attention math)
# --------------------------------------------------------------------------
def reference_forward(params, mask, h, out_dim):
    q_h, k_h, v_h = (x.astype(jnp.float32) for x in project_qkv(params, h))
    s = (q_h @ k_h.T) / math.sqrt(float(out_dim))            # [dst, src]
    p = jnp.exp(jnp.clip(s, -5.0, 5.0)) * (mask != 0)
    z = p.sum(-1, keepdims=True)
    return ((p @ v_h) / z).astype(jnp.float16)


# --------------------------------------------------------------------------
if __name__ == "__main__":
    in_dim, out_dim, num_heads, use_bias = 32, 8, 4, True

    key = jax.random.PRNGKey(0)
    k_param, k_feat, k_edge, k_feat2 = jax.random.split(key, 4)
    params = init_params(k_param, in_dim, out_dim, num_heads, use_bias)

    # ---- Test 1: small random graph (N=64, p=0.15 + ring + self-loops) ----
    N1 = 64
    h1 = jax.random.normal(k_feat, (N1, in_dim), jnp.float32)
    rand_adj = jax.random.bernoulli(k_edge, 0.15, (N1, N1))
    ring = jnp.eye(N1, k=1, dtype=bool) | jnp.eye(N1, k=-(N1 - 1), dtype=bool)
    mask1 = (rand_adj | ring | jnp.eye(N1, dtype=bool)).astype(jnp.float32)

    out1 = multi_head_attention_flash_sparse_forward(params, mask1, h1, out_dim)
    out1 = jax.block_until_ready(out1)
    ref1 = reference_forward(params, mask1, h1, out_dim)
    np.testing.assert_allclose(np.asarray(out1, np.float32),
                               np.asarray(ref1, np.float32),
                               rtol=3e-2, atol=3e-2)
    assert out1.shape == (N1, out_dim * num_heads)
    assert out1.dtype == jnp.float16

    # ---- Test 2: banded graph (N=300) -> exercises multi-tile grid and
    #      block-sparse skipping of empty src blocks ----
    N2 = 300
    h2 = jax.random.normal(k_feat2, (N2, in_dim), jnp.float32)
    idx = np.arange(N2)
    band = (np.abs(idx[:, None] - idx[None, :]) < 40)        # incl. self-loops
    mask2 = jnp.asarray(band.astype(np.float32))

    out2 = multi_head_attention_flash_sparse_forward(params, mask2, h2, out_dim)
    out2 = jax.block_until_ready(out2)
    ref2 = reference_forward(params, mask2, h2, out_dim)
    np.testing.assert_allclose(np.asarray(out2, np.float32),
                               np.asarray(ref2, np.float32),
                               rtol=3e-2, atol=3e-2)
    assert out2.shape == (N2, out_dim * num_heads)
    assert out2.dtype == jnp.float16

    print("KERNEL_OK")
</pallas_src>

<mosaic_0001>
module attributes {stable_mosaic.version = 11 : i64} {
  func.func @_graph_attention_kernel(%arg0: i32, %arg1: i32, %arg2: memref<1x1xi32, #tpu.memory_space<smem>>, %arg3: memref<1xi32, #tpu.memory_space<smem>>, %arg4: memref<128x128xbf16, #tpu.memory_space<vmem>>, %arg5: memref<128x128xbf16, #tpu.memory_space<vmem>>, %arg6: memref<128x128xbf16, #tpu.memory_space<vmem>>, %arg7: memref<128x128xi8, #tpu.memory_space<vmem>>, %arg8: memref<128x128xbf16, #tpu.memory_space<vmem>>, %arg9: memref<128x128xf32, #tpu.memory_space<vmem>>, %arg10: memref<128x1xf32, #tpu.memory_space<vmem>>) attributes {dimension_semantics = [#tpu.dimension_semantics<parallel>, #tpu.dimension_semantics<arbitrary>], iteration_bounds = array<i64: 1, 1>, scalar_prefetch = 2 : i64, scratch_operands = 2 : i64, tpu.core_type = #tpu.core_type<tc>, window_params = [{transform_indices = @transform_0, window_bounds = array<i64: 128, 128>}, {transform_indices = @transform_1, window_bounds = array<i64: 128, 128>}, {transform_indices = @transform_2, window_bounds = array<i64: 128, 128>}, {transform_indices = @transform_3, window_bounds = array<i64: 128, 128>}, {transform_indices = @transform_4, window_bounds = array<i64: 128, 128>}]} {
    %c0_i32 = arith.constant 0 : i32
    %0 = arith.cmpi eq, %arg1, %c0_i32 : i32
    %1 = arith.extui %0 : i1 to i32
    %c0_i32_0 = arith.constant 0 : i32
    %2 = arith.cmpi ne, %1, %c0_i32_0 : i32
    scf.if %2 {
      %cst = arith.constant 0.000000e+00 : f32
      %11 = vector.broadcast %cst : f32 to vector<128x128xf32>
      %c0 = arith.constant 0 : index
      %c0_4 = arith.constant 0 : index
      %12 = vector.load %arg9[%c0, %c0_4] : memref<128x128xf32, #tpu.memory_space<vmem>>, vector<128x128xf32>
      tpu.vector_store %arg9[%c0, %c0_4], %11 {strides = array<i32>} : memref<128x128xf32, #tpu.memory_space<vmem>>, vector<128x128xf32>,
      %cst_5 = arith.constant 0.000000e+00 : f32
      %13 = vector.broadcast %cst_5 : f32 to vector<128x1xf32>
      %c0_6 = arith.constant 0 : index
      %c0_7 = arith.constant 0 : index
      %14 = vector.load %arg10[%c0_6, %c0_7] : memref<128x1xf32, #tpu.memory_space<vmem>>, vector<128x1xf32>
      tpu.vector_store %arg10[%c0_6, %c0_7], %13 {strides = array<i32>} : memref<128x1xf32, #tpu.memory_space<vmem>>, vector<128x1xf32>,
    } else {
    }
    %3 = arith.index_cast %arg0 : i32 to index
    %4 = memref.load %arg3[%3] : memref<1xi32, #tpu.memory_space<smem>>
    %5 = arith.cmpi slt, %arg1, %4 : i32
    %6 = arith.extui %5 : i1 to i32
    %c0_i32_1 = arith.constant 0 : i32
    %7 = arith.cmpi ne, %6, %c0_i32_1 : i32
    scf.if %7 {
      %c0 = arith.constant 0 : index
      %c0_4 = arith.constant 0 : index
      %11 = vector.load %arg4[%c0, %c0_4] : memref<128x128xbf16, #tpu.memory_space<vmem>>, vector<128x128xbf16>
      %c0_5 = arith.constant 0 : index
      %c0_6 = arith.constant 0 : index
      %12 = vector.load %arg5[%c0_5, %c0_6] : memref<128x128xbf16, #tpu.memory_space<vmem>>, vector<128x128xbf16>
      %c0_7 = arith.constant 0 : index
      %c0_8 = arith.constant 0 : index
      %13 = vector.load %arg6[%c0_7, %c0_8] : memref<128x128xbf16, #tpu.memory_space<vmem>>, vector<128x128xbf16>
      %c0_9 = arith.constant 0 : index
      %c0_10 = arith.constant 0 : index
      %14 = vector.load %arg7[%c0_9, %c0_10] : memref<128x128xi8, #tpu.memory_space<vmem>>, vector<128x128xi8>
      %cst = arith.constant dense<0.000000e+00> : vector<128x128xf32>
      %15 = tpu.matmul %11, %12, %cst {dimension_numbers = #tpu.dot_dimension_numbers<[1], [1], [0], [0], [0, 0, 1, 0], [], []>} : vector<128x128xbf16>, vector<128x128xbf16>, vector<128x128xf32> -> vector<128x128xf32>
      %cst_11 = arith.constant 0.353553385 : f32
      %16 = vector.broadcast %cst_11 : f32 to vector<128x128xf32>
      %17 = arith.mulf %15, %16 : vector<128x128xf32>
      %cst_12 = arith.constant -5.000000e+00 : f32
      %cst_13 = arith.constant 5.000000e+00 : f32
      %18 = vector.broadcast %cst_12 : f32 to vector<128x128xf32>
      %19 = arith.maximumf %18, %17 : vector<128x128xf32>
      %20 = vector.broadcast %cst_13 : f32 to vector<128x128xf32>
      %21 = arith.minimumf %20, %19 : vector<128x128xf32>
      %c0_i8 = arith.constant 0 : i8
      %22 = vector.broadcast %c0_i8 : i8 to vector<128x128xi8>
      %23 = arith.cmpi ne, %14, %22 : vector<128x128xi8>
      %24 = math.exp %21 : vector<128x128xf32>
      %cst_14 = arith.constant 0.000000e+00 : f32
      %25 = vector.broadcast %cst_14 : f32 to vector<128x128xf32>
      %26 = arith.select %23, %24, %25 : vector<128x128xi1>, vector<128x128xf32>
      %c0_15 = arith.constant 0 : index
      %c0_16 = arith.constant 0 : index
      %27 = vector.load %arg10[%c0_15, %c0_16] : memref<128x1xf32, #tpu.memory_space<vmem>>, vector<128x1xf32>
      %cst_17 = arith.constant dense<0.000000e+00> : vector<128xf32>
      %28 = vector.multi_reduction <add>, %26, %cst_17 [1] : vector<128x128xf32> to vector<128xf32>
      %29 = vector.shape_cast %28 : vector<128xf32> to vector<128x1xf32>
      %30 = arith.addf %27, %29 : vector<128x1xf32>
      %c0_18 = arith.constant 0 : index
      %c0_19 = arith.constant 0 : index
      %31 = vector.load %arg10[%c0_18, %c0_19] : memref<128x1xf32, #tpu.memory_space<vmem>>, vector<128x1xf32>
      tpu.vector_store %arg10[%c0_18, %c0_19], %30 {strides = array<i32>} : memref<128x1xf32, #tpu.memory_space<vmem>>, vector<128x1xf32>,
      %c0_20 = arith.constant 0 : index
      %c0_21 = arith.constant 0 : index
      %32 = vector.load %arg9[%c0_20, %c0_21] : memref<128x128xf32, #tpu.memory_space<vmem>>, vector<128x128xf32>
      %33 = arith.truncf %26 : vector<128x128xf32> to vector<128x128xbf16>
      %cst_22 = arith.constant dense<0.000000e+00> : vector<128x128xf32>
      %34 = tpu.matmul %33, %13, %cst_22 {dimension_numbers = #tpu.dot_dimension_numbers<[1], [0], [0], [1], [0, 0, 1, 1], [], []>} : vector<128x128xbf16>, vector<128x128xbf16>, vector<128x128xf32> -> vector<128x128xf32>
      %35 = arith.addf %32, %34 : vector<128x128xf32>
      %c0_23 = arith.constant 0 : index
      %c0_24 = arith.constant 0 : index
      %36 = vector.load %arg9[%c0_23, %c0_24] : memref<128x128xf32, #tpu.memory_space<vmem>>, vector<128x128xf32>
      tpu.vector_store %arg9[%c0_23, %c0_24], %35 {strides = array<i32>} : memref<128x128xf32, #tpu.memory_space<vmem>>, vector<128x128xf32>,
    } else {
    }
    %c0_i32_2 = arith.constant 0 : i32
    %8 = arith.cmpi eq, %arg1, %c0_i32_2 : i32
    %9 = arith.extui %8 : i1 to i32
    %c0_i32_3 = arith.constant 0 : i32
    %10 = arith.cmpi ne, %9, %c0_i32_3 : i32
    scf.if %10 {
      %c0 = arith.constant 0 : index
      %c0_4 = arith.constant 0 : index
      %11 = vector.load %arg9[%c0, %c0_4] : memref<128x128xf32, #tpu.memory_space<vmem>>, vector<128x128xf32>
      %c0_5 = arith.constant 0 : index
      %c0_6 = arith.constant 0 : index
      %12 = vector.load %arg10[%c0_5, %c0_6] : memref<128x1xf32, #tpu.memory_space<vmem>>, vector<128x1xf32>
      %13 = tpu.reciprocal %12 {approx = true} : vector<128x1xf32> -> vector<128x1xf32>
      %14 = vector.broadcast %13 : vector<128x1xf32> to vector<128x128xf32>
      %15 = arith.mulf %11, %14 : vector<128x128xf32>
      %16 = arith.truncf %15 : vector<128x128xf32> to vector<128x128xbf16>
      %c0_7 = arith.constant 0 : index
      %c0_8 = arith.constant 0 : index
      %17 = vector.load %arg8[%c0_7, %c0_8] : memref<128x128xbf16, #tpu.memory_space<vmem>>, vector<128x128xbf16>
      tpu.vector_store %arg8[%c0_7, %c0_8], %16 {strides = array<i32>} : memref<128x128xbf16, #tpu.memory_space<vmem>>, vector<128x128xbf16>,
    } else {
    }
    return
  }
  func.func @transform_0(%arg0: i32, %arg1: i32, %arg2: memref<1x1xi32, #tpu.memory_space<smem>>, %arg3: memref<1xi32, #tpu.memory_space<smem>>) -> (i32, i32) {
    %c0_i32 = arith.constant 0 : i32
    %c0_i32_0 = arith.constant 0 : i32
    return %arg0, %c0_i32 : i32, i32
  }
  func.func @transform_1(%arg0: i32, %arg1: i32, %arg2: memref<1x1xi32, #tpu.memory_space<smem>>, %arg3: memref<1xi32, #tpu.memory_space<smem>>) -> (i32, i32) {
    %0 = arith.index_cast %arg0 : i32 to index
    %1 = arith.index_cast %arg1 : i32 to index
    %2 = memref.load %arg2[%0, %1] : memref<1x1xi32, #tpu.memory_space<smem>>
    %c0_i32 = arith.constant 0 : i32
    %c0_i32_0 = arith.constant 0 : i32
    return %2, %c0_i32 : i32, i32
  }
  func.func @transform_2(%arg0: i32, %arg1: i32, %arg2: memref<1x1xi32, #tpu.memory_space<smem>>, %arg3: memref<1xi32, #tpu.memory_space<smem>>) -> (i32, i32) {
    %0 = arith.index_cast %arg0 : i32 to index
    %1 = arith.index_cast %arg1 : i32 to index
    %2 = memref.load %arg2[%0, %1] : memref<1x1xi32, #tpu.memory_space<smem>>
    %c0_i32 = arith.constant 0 : i32
    %c0_i32_0 = arith.constant 0 : i32
    return %2, %c0_i32 : i32, i32
  }
  func.func @transform_3(%arg0: i32, %arg1: i32, %arg2: memref<1x1xi32, #tpu.memory_space<smem>>, %arg3: memref<1xi32, #tpu.memory_space<smem>>) -> (i32, i32) {
    %0 = arith.index_cast %arg0 : i32 to index
    %1 = arith.index_cast %arg1 : i32 to index
    %2 = memref.load %arg2[%0, %1] : memref<1x1xi32, #tpu.memory_space<smem>>
    %c0_i32 = arith.constant 0 : i32
    return %arg0, %2 : i32, i32
  }
  func.func @transform_4(%arg0: i32, %arg1: i32, %arg2: memref<1x1xi32, #tpu.memory_space<smem>>, %arg3: memref<1xi32, #tpu.memory_space<smem>>) -> (i32, i32) {
    %c0_i32 = arith.constant 0 : i32
    %c0_i32_0 = arith.constant 0 : i32
    return %arg0, %c0_i32 : i32, i32
  }
}

</mosaic_0001>

<llo_original>
// kernel: tpu_custom_call.1
$region0: #{tpu_custom_call.1}
  #allocation0 [shape = 'u32[]', space=smem, size = 0x4, offset = 0x4, fixed_abs, tag = 'smem constant byte address 0x4 - core index']
  #allocation1 [shape = 'u32[72,128]{1,0:T(1,128)}', space=vmem, size = 0x9000, scoped, tag = 'internal scratch']
  #allocation2 [shape = 'f32[128,128]{1,0:T(8,128)}', space=vmem, size = 0x10000, scoped, tag = 'scratch operand']
  #allocation3 [shape = 'f32[128,1]{1,0:T(8,128)}', space=vmem, size = 0x10000, scoped, tag = 'scratch operand']
  #allocation4 [shape = 's32[1]{0}', space=sflag, size = 0x4, scoped, tag = 'scoped memory for tpu_custom_call.1']
  #allocation5 [shape = 's32[1,1]{1,0:T(1,128)S(6)}', space=smem, size = 0x200, scoped, tag = 'prefetched SMEM operand 0']
  #allocation6 [shape = 's32[1]{0:T(128)S(6)}', space=smem, size = 0x200, scoped, tag = 'prefetched SMEM operand 1']
  %s0 = inlined_call_operand.<no memory space> [shape: s32[1,1], index: 0, kind: input, shape index: {}]
  %s1 = inlined_call_operand.<no memory space> [shape: s32[1], index: 1, kind: input, shape index: {}]
  %s2 = inlined_call_operand.hbm [shape: bf16[128,128], index: 2, kind: input, shape index: {}]
  %s3 = inlined_call_operand.hbm [shape: bf16[128,128], index: 3, kind: input, shape index: {}]
  %s4 = inlined_call_operand.hbm [shape: bf16[128,128], index: 4, kind: input, shape index: {}]
  %s5 = inlined_call_operand.hbm [shape: s8[128,128], index: 5, kind: input, shape index: {}]
  %s6 = inlined_call_operand.hbm [shape: bf16[128,128], index: 6, kind: output, shape index: {}]
  %s7 = sld [smem:[#allocation0]]
  $region54: #{tpu_custom_call.1} parent=0
    _
  %s9 = ssub.s32 1, %s7
  %s10 = scalar_select 0, %s9, %s7
  %11 = sst [smem:[#allocation5]] %s0
  %12 = sst [smem:[#allocation6]] %s1
  $region1: #{tpu_custom_call.1} parent=0
    #allocation7 [shape = 'u8[32768]{0}', space=vmem, size = 0x8000, scoped, tag = 'input window, operand 2, single buffered']
    #allocation8 [shape = 's32[1]{0}', space=sflag, size = 0x4, scoped, tag = 'scoped memory for tpu_custom_call.1']
    #allocation9 [shape = 's32[1]{0}', space=sflag, size = 0x4, scoped, tag = 'scoped memory for tpu_custom_call.1']
    #allocation10 [shape = 'u8[32768]{0}', space=vmem, size = 0x8000, scoped, tag = 'input window, operand 3, single buffered']
    #allocation11 [shape = 's32[1]{0}', space=sflag, size = 0x4, scoped, tag = 'scoped memory for tpu_custom_call.1']
    #allocation12 [shape = 'u8[32768]{0}', space=vmem, size = 0x8000, scoped, tag = 'input window, operand 4, single buffered']
    #allocation13 [shape = 'u8[16384]{0}', space=vmem, size = 0x4000, scoped, tag = 'input window, operand 5, single buffered']
    #allocation14 [shape = 's32[1]{0}', space=sflag, size = 0x4, scoped, tag = 'scoped memory for tpu_custom_call.1']
    #allocation15 [shape = 'u8[32768]{0}', space=vmem, size = 0x8000, scoped, tag = 'output window, operand 0, single buffered']
    %13 = vsyncpa [#allocation8], 0
    %14 = vsyncpa [#allocation11], 0
    %15 = vsyncpa [#allocation14], 0
    %16 = vsyncpa [#allocation9], 0
    // Predicated region
    $region2: #{tpu_custom_call.1} parent=1 // pred_check
      _
    $region3: #{tpu_custom_call.1} parent=1 // pred_check_branch
      %18 = sbr.rel (0) target = $region5
    $region4: #{tpu_custom_call.1} parent=1 // pred_region
      %20 = vsyncadd [#allocation8], 0
      %s21 = sshll.u32 %s2, 4
      %s22 = int_to_ptr.hbm [resolvable:$true] %s21
      %s23 = sshll.u32 [#allocation7], 4
      %s24 = int_to_ptr.vmem [resolvable:$true] %s23
      %29 = dma.hbm_to_vmem [thread:$0]  %s22, 1024, %s24, [#allocation8], 64, 64, 4
    $region5: #{tpu_custom_call.1} parent=1 // pred_fallthru
      _
    // Predicated region
    $region6: #{tpu_custom_call.1} parent=1 // pred_check
      _
    $region7: #{tpu_custom_call.1} parent=1 // pred_check_branch
      %31 = sbr.rel (0) target = $region9
    $region8: #{tpu_custom_call.1} parent=1 // pred_region
      %s32 = sadd.s32 0, 0
      %s33 = smul.u32 %s32, 128
      %s34 = sadd.s32 %s33, 0
      %s35 = sld [smem:[#allocation5 + %s34]]
      %s36 = smul.u32 16, %s35
      %38 = vsyncadd [#allocation11], 0
      %s39 = smul.addr %s36, 4
      %s40 = scalar_lea.hbm %s3, %s39
      %s41 = sshll.u32 %s40, 4
      %s42 = int_to_ptr.hbm [resolvable:$true] %s41
      %s43 = sshll.u32 [#allocation10], 4
      %s44 = int_to_ptr.vmem [resolvable:$true] %s43
      %49 = dma.hbm_to_vmem [thread:$0]  %s42, 1024, %s44, [#allocation11], 64, 64, 4
    $region9: #{tpu_custom_call.1} parent=1 // pred_fallthru
      _
    // Predicated region
    $region10: #{tpu_custom_call.1} parent=1 // pred_check
      _
    $region11: #{tpu_custom_call.1} parent=1 // pred_check_branch
      %51 = sbr.rel (0) target = $region13
    $region12: #{tpu_custom_call.1} parent=1 // pred_region
      %s52 = sadd.s32 0, 0
      %s53 = smul.u32 %s52, 128
      %s54 = sadd.s32 %s53, 0
      %s55 = sld [smem:[#allocation5 + %s54]]
      %s56 = smul.u32 16, %s55
      %58 = vsyncadd [#allocation11], 0
      %s59 = smul.addr %s56, 4
      %s60 = scalar_lea.hbm %s4, %s59
      %s61 = sshll.u32 %s60, 4
      %s62 = int_to_ptr.hbm [resolvable:$true] %s61
      %s63 = sshll.u32 [#allocation12], 4
      %s64 = int_to_ptr.vmem [resolvable:$true] %s63
      %69 = dma.hbm_to_vmem [thread:$0]  %s62, 1024, %s64, [#allocation11], 64, 64, 4
    $region13: #{tpu_custom_call.1} parent=1 // pred_fallthru
      _
    // Predicated region
    $region14: #{tpu_custom_call.1} parent=1 // pred_check
      _
    $region15: #{tpu_custom_call.1} parent=1 // pred_check_branch
      %71 = sbr.rel (0) target = $region17
    $region16: #{tpu_custom_call.1} parent=1 // pred_region
      %s72 = sadd.s32 0, 0
      %s73 = smul.u32 %s72, 128
      %s74 = sadd.s32 %s73, 0
      %s75 = sld [smem:[#allocation5 + %s74]]
      %77 = vsyncadd [#allocation14], 0
      %s78 = smul.addr %s75, 8
      %s79 = scalar_lea.hbm %s5, %s78
      %s80 = sshll.u32 %s79, 4
      %s81 = int_to_ptr.hbm [resolvable:$true] %s80
      %s82 = sshll.u32 [#allocation13], 4
      %s83 = int_to_ptr.vmem [resolvable:$true] %s82
      %88 = dma.hbm_to_vmem [thread:$0]  %s81, 512, %s83, [#allocation14], 128, 128, 8
    $region17: #{tpu_custom_call.1} parent=1 // pred_fallthru
      _
    // Predicated region
    $region18: #{tpu_custom_call.1} parent=1 // pred_check
      _
    $region19: #{tpu_custom_call.1} parent=1 // pred_check_branch
      %90 = sbr.rel (0) target = $region21
    $region20: #{tpu_custom_call.1} parent=1 // pred_region
      %92 = dma.done [#allocation8], 1024
    $region21: #{tpu_custom_call.1} parent=1 // pred_fallthru
      _
    // Predicated region
    $region22: #{tpu_custom_call.1} parent=1 // pred_check
      _
    $region23: #{tpu_custom_call.1} parent=1 // pred_check_branch
      %94 = sbr.rel (0) target = $region25
    $region24: #{tpu_custom_call.1} parent=1 // pred_region
      %96 = dma.done [#allocation11], 1024
    $region25: #{tpu_custom_call.1} parent=1 // pred_fallthru
      _
    // Predicated region
    $region26: #{tpu_custom_call.1} parent=1 // pred_check
      _
    $region27: #{tpu_custom_call.1} parent=1 // pred_check_branch
      %98 = sbr.rel (0) target = $region29
    $region28: #{tpu_custom_call.1} parent=1 // pred_region
      %100 = dma.done [#allocation11], 1024
    $region29: #{tpu_custom_call.1} parent=1 // pred_fallthru
      _
    // Predicated region
    $region30: #{tpu_custom_call.1} parent=1 // pred_check
      _
    $region31: #{tpu_custom_call.1} parent=1 // pred_check_branch
      %102 = sbr.rel (0) target = $region33
    $region32: #{tpu_custom_call.1} parent=1 // pred_region
      %104 = dma.done [#allocation14], 512
    $region33: #{tpu_custom_call.1} parent=1 // pred_fallthru
      _
    %s105 = sadd.s32 0, 0
    %s106 = smul.u32 %s105, 128
    %s107 = sadd.s32 %s106, 0
    %s108 = sld [smem:[#allocation5 + %s107]]
    %s109 = smul.u32 16, %s108
    %s110 = sadd.s32 0, 0
    %s111 = smul.u32 %s110, 128
    %s112 = sadd.s32 %s111, 0
    %s113 = sld [smem:[#allocation5 + %s112]]
    %s114 = smul.u32 16, %s113
    %s115 = sadd.s32 0, 0
    %s116 = smul.u32 %s115, 128
    %s117 = sadd.s32 %s116, 0
    %s118 = sld [smem:[#allocation5 + %s117]]
    %p121 = scmp.eq.s32.totalorder 0, 0
    // Predicated region
    $region34: #{tpu_custom_call.1} parent=1 // pred_check
      %p122 = pneg %p121
    $region35: #{tpu_custom_call.1} parent=1 // pred_check_branch
      %124 = sbr.rel (%p122) target = $region37
    $region36: #{tpu_custom_call.1} parent=1 // pred_region
      %125 = vst [vmem:[#allocation2] sm:$0xff] 0.0
      %126 = vst [vmem:[#allocation2 + $0x8] sm:$0xff] 0.0
      %127 = vst [vmem:[#allocation2 + $0x10] sm:$0xff] 0.0
      %128 = vst [vmem:[#allocation2 + $0x18] sm:$0xff] 0.0
      %129 = vst [vmem:[#allocation2 + $0x20] sm:$0xff] 0.0
      %130 = vst [vmem:[#allocation2 + $0x28] sm:$0xff] 0.0
      %131 = vst [vmem:[#allocation2 + $0x30] sm:$0xff] 0.0
      %132 = vst [vmem:[#allocation2 + $0x38] sm:$0xff] 0.0
      %133 = vst [vmem:[#allocation2 + $0x40] sm:$0xff] 0.0
      %134 = vst [vmem:[#allocation2 + $0x48] sm:$0xff] 0.0
      %135 = vst [vmem:[#allocation2 + $0x50] sm:$0xff] 0.0
      %136 = vst [vmem:[#allocation2 + $0x58] sm:$0xff] 0.0
      %137 = vst [vmem:[#allocation2 + $0x60] sm:$0xff] 0.0
      %138 = vst [vmem:[#allocation2 + $0x68] sm:$0xff] 0.0
      %139 = vst [vmem:[#allocation2 + $0x70] sm:$0xff] 0.0
      %140 = vst [vmem:[#allocation2 + $0x78] sm:$0xff] 0.0
      %vm141 = vcmask 7168
      %142 = vst.msk [vmem:[#allocation3] sm:$0xff] %vm141, 0.0
      %143 = vst.msk [vmem:[#allocation3 + $0x8] sm:$0xff] %vm141, 0.0
      %144 = vst.msk [vmem:[#allocation3 + $0x10] sm:$0xff] %vm141, 0.0
      %145 = vst.msk [vmem:[#allocation3 + $0x18] sm:$0xff] %vm141, 0.0
      %146 = vst.msk [vmem:[#allocation3 + $0x20] sm:$0xff] %vm141, 0.0
      %147 = vst.msk [vmem:[#allocation3 + $0x28] sm:$0xff] %vm141, 0.0
      %148 = vst.msk [vmem:[#allocation3 + $0x30] sm:$0xff] %vm141, 0.0
      %149 = vst.msk [vmem:[#allocation3 + $0x38] sm:$0xff] %vm141, 0.0
      %150 = vst.msk [vmem:[#allocation3 + $0x40] sm:$0xff] %vm141, 0.0
      %151 = vst.msk [vmem:[#allocation3 + $0x48] sm:$0xff] %vm141, 0.0
      %152 = vst.msk [vmem:[#allocation3 + $0x50] sm:$0xff] %vm141, 0.0
      %153 = vst.msk [vmem:[#allocation3 + $0x58] sm:$0xff] %vm141, 0.0
      %154 = vst.msk [vmem:[#allocation3 + $0x60] sm:$0xff] %vm141, 0.0
      %155 = vst.msk [vmem:[#allocation3 + $0x68] sm:$0xff] %vm141, 0.0
      %156 = vst.msk [vmem:[#allocation3 + $0x70] sm:$0xff] %vm141, 0.0
      %157 = vst.msk [vmem:[#allocation3 + $0x78] sm:$0xff] %vm141, 0.0
    $region37: #{tpu_custom_call.1} parent=1 // pred_fallthru
      _
    %s158 = sld [smem:[#allocation6]]
    %p159 = scmp.lt.s32.totalorder 0, %s158
    // Predicated region
    $region38: #{tpu_custom_call.1} parent=1 // pred_check
      %p160 = pneg %p159
    $region39: #{tpu_custom_call.1} parent=1 // pred_check_branch
      %162 = sbr.rel (%p160) target = $region41
    $region40: #{tpu_custom_call.1} parent=1 // pred_region
      %v163 = vld [vmem:[#allocation7] sm:$0xf]
      %v164 = vld [vmem:[#allocation7 + $0x4] sm:$0xf]
      %v165 = vld [vmem:[#allocation7 + $0x8] sm:$0xf]
      %v166 = vld [vmem:[#allocation7 + $0xc] sm:$0xf]
      %v167 = vld [vmem:[#allocation7 + $0x10] sm:$0xf]
      %v168 = vld [vmem:[#allocation7 + $0x14] sm:$0xf]
      %v169 = vld [vmem:[#allocation7 + $0x18] sm:$0xf]
      %v170 = vld [vmem:[#allocation7 + $0x1c] sm:$0xf]
      %v171 = vld [vmem:[#allocation7 + $0x20] sm:$0xf]
      %v172 = vld [vmem:[#allocation7 + $0x24] sm:$0xf]
      %v173 = vld [vmem:[#allocation7 + $0x28] sm:$0xf]
      %v174 = vld [vmem:[#allocation7 + $0x2c] sm:$0xf]
      %v175 = vld [vmem:[#allocation7 + $0x30] sm:$0xf]
      %v176 = vld [vmem:[#allocation7 + $0x34] sm:$0xf]
      %v177 = vld [vmem:[#allocation7 + $0x38] sm:$0xf]
      %v178 = vld [vmem:[#allocation7 + $0x3c] sm:$0xf]
      %v179 = vld [vmem:[#allocation10] sm:$0xf]
      %v180 = vld [vmem:[#allocation10 + $0x4] sm:$0xf]
      %v181 = vld [vmem:[#allocation10 + $0x8] sm:$0xf]
      %v182 = vld [vmem:[#allocation10 + $0xc] sm:$0xf]
      %v183 = vld [vmem:[#allocation10 + $0x10] sm:$0xf]
      %v184 = vld [vmem:[#allocation10 + $0x14] sm:$0xf]
      %v185 = vld [vmem:[#allocation10 + $0x18] sm:$0xf]
      %v186 = vld [vmem:[#allocation10 + $0x1c] sm:$0xf]
      %v187 = vld [vmem:[#allocation10 + $0x20] sm:$0xf]
      %v188 = vld [vmem:[#allocation10 + $0x24] sm:$0xf]
      %v189 = vld [vmem:[#allocation10 + $0x28] sm:$0xf]
      %v190 = vld [vmem:[#allocation10 + $0x2c] sm:$0xf]
      %v191 = vld [vmem:[#allocation10 + $0x30] sm:$0xf]
      %v192 = vld [vmem:[#allocation10 + $0x34] sm:$0xf]
      %v193 = vld [vmem:[#allocation10 + $0x38] sm:$0xf]
      %v194 = vld [vmem:[#allocation10 + $0x3c] sm:$0xf]
      %v195 = vld [vmem:[#allocation12] sm:$0xf]
      %v196 = vld [vmem:[#allocation12 + $0x4] sm:$0xf]
      %v197 = vld [vmem:[#allocation12 + $0x8] sm:$0xf]
      %v198 = vld [vmem:[#allocation12 + $0xc] sm:$0xf]
      %v199 = vld [vmem:[#allocation12 + $0x10] sm:$0xf]
      %v200 = vld [vmem:[#allocation12 + $0x14] sm:$0xf]
      %v201 = vld [vmem:[#allocation12 + $0x18] sm:$0xf]
      %v202 = vld [vmem:[#allocation12 + $0x1c] sm:$0xf]
      %v203 = vld [vmem:[#allocation12 + $0x20] sm:$0xf]
      %v204 = vld [vmem:[#allocation12 + $0x24] sm:$0xf]
      %v205 = vld [vmem:[#allocation12 + $0x28] sm:$0xf]
      %v206 = vld [vmem:[#allocation12 + $0x2c] sm:$0xf]
      %v207 = vld [vmem:[#allocation12 + $0x30] sm:$0xf]
      %v208 = vld [vmem:[#allocation12 + $0x34] sm:$0xf]
      %v209 = vld [vmem:[#allocation12 + $0x38] sm:$0xf]
      %v210 = vld [vmem:[#allocation12 + $0x3c] sm:$0xf]
      %v211 = vld [vmem:[#allocation13] sm:$0xff]
      %v212 = vld [vmem:[#allocation13 + $0x8] sm:$0xff]
      %v213 = vld [vmem:[#allocation13 + $0x10] sm:$0xff]
      %v214 = vld [vmem:[#allocation13 + $0x18] sm:$0xff]
      %v231 = vunpack.c.l.b16 %v163
      %v232 = vunpack.c.l.b16 %v164
      %v233 = vunpack.c.l.b16 %v165
      %v234 = vunpack.c.l.b16 %v166
      %v235 = vunpack.c.l.b16 %v167
      %v236 = vunpack.c.l.b16 %v168
      %v237 = vunpack.c.l.b16 %v169
      %v238 = vunpack.c.l.b16 %v170
      %v239 = vunpack.c.l.b16 %v171
      %v240 = vunpack.c.l.b16 %v172
      %v241 = vunpack.c.l.b16 %v173
      %v242 = vunpack.c.l.b16 %v174
      %v243 = vunpack.c.l.b16 %v175
      %v244 = vunpack.c.l.b16 %v176
      %v245 = vunpack.c.l.b16 %v177
      %v246 = vunpack.c.l.b16 %v178
      %v247 = vpack.c.b16 %v232, %v231
      %v248 = vpack.c.b16 %v234, %v233
      %v249 = vpack.c.b16 %v236, %v235
      %v250 = vpack.c.b16 %v238, %v237
      %v251 = vpack.c.b16 %v240, %v239
      %v252 = vpack.c.b16 %v242, %v241
      %v253 = vpack.c.b16 %v244, %v243
      %v254 = vpack.c.b16 %v246, %v245
      %v279 = vunpack.c.l.b16 %v179
      %v280 = vunpack.c.l.b16 %v180
      %v281 = vunpack.c.l.b16 %v181
      %v282 = vunpack.c.l.b16 %v182
      %v283 = vunpack.c.l.b16 %v183
      %v284 = vunpack.c.l.b16 %v184
      %v285 = vunpack.c.l.b16 %v185
      %v286 = vunpack.c.l.b16 %v186
      %v287 = vunpack.c.l.b16 %v187
      %v288 = vunpack.c.l.b16 %v188
      %v289 = vunpack.c.l.b16 %v189
      %v290 = vunpack.c.l.b16 %v190
      %v291 = vunpack.c.l.b16 %v191
      %v292 = vunpack.c.l.b16 %v192
      %v293 = vunpack.c.l.b16 %v193
      %v294 = vunpack.c.l.b16 %v194
      %v295 = vpack.c.b16 %v280, %v279
      %v296 = vpack.c.b16 %v282, %v281
      %v297 = vpack.c.b16 %v284, %v283
      %v298 = vpack.c.b16 %v286, %v285
      %v299 = vpack.c.b16 %v288, %v287
      %v300 = vpack.c.b16 %v290, %v289
      %v301 = vpack.c.b16 %v292, %v291
      %v302 = vpack.c.b16 %v294, %v293
      %311 = vmatpush.bf16.xpose.msra.mxu0 %v302
      %312 = vmatpush.bf16.xpose.msra.mxu0 %v301
      %313 = vmatpush.bf16.xpose.msra.mxu0 %v300
      %314 = vmatpush.bf16.xpose.msra.mxu0 %v299
      %315 = vmatpush.bf16.xpose.msra.mxu0 %v298
      %316 = vmatpush.bf16.xpose.msra.mxu0 %v297
      %317 = vmatpush.bf16.xpose.msra.mxu0 %v296
      %318 = vmatpush.bf16.xpose.msra.mxu0 %v295
      %319 = vmatmul.bf16.gmra.mxu0 %v247
      %v320 = vpop.f32.mrf.mxu0
      %v321 = vadd.f32 0.0, %v320
      %v322 = vpop.f32.mrf.mxu0
      %v323 = vadd.f32 0.0, %v322
      %324 = vmatmul.bf16.gmra.mxu0 %v248
      %v325 = vpop.f32.mrf.mxu0
      %v326 = vadd.f32 0.0, %v325
      %v327 = vpop.f32.mrf.mxu0
      %v328 = vadd.f32 0.0, %v327
      %329 = vmatmul.bf16.gmra.mxu0 %v249
      %v330 = vpop.f32.mrf.mxu0
      %v331 = vadd.f32 0.0, %v330
      %v332 = vpop.f32.mrf.mxu0
      %v333 = vadd.f32 0.0, %v332
      %334 = vmatmul.bf16.gmra.mxu0 %v250
      %v335 = vpop.f32.mrf.mxu0
      %v336 = vadd.f32 0.0, %v335
      %v337 = vpop.f32.mrf.mxu0
      %v338 = vadd.f32 0.0, %v337
      %339 = vmatmul.bf16.gmra.mxu0 %v251
      %v340 = vpop.f32.mrf.mxu0
      %v341 = vadd.f32 0.0, %v340
      %v342 = vpop.f32.mrf.mxu0
      %v343 = vadd.f32 0.0, %v342
      %344 = vmatmul.bf16.gmra.mxu0 %v252
      %v345 = vpop.f32.mrf.mxu0
      %v346 = vadd.f32 0.0, %v345
      %v347 = vpop.f32.mrf.mxu0
      %v348 = vadd.f32 0.0, %v347
      %349 = vmatmul.bf16.gmra.mxu0 %v253
      %v350 = vpop.f32.mrf.mxu0
      %v351 = vadd.f32 0.0, %v350
      %v352 = vpop.f32.mrf.mxu0
      %v353 = vadd.f32 0.0, %v352
      %354 = vmatmul.bf16.gmra.mxu0 %v254
      %v355 = vpop.f32.mrf.mxu0
      %v356 = vadd.f32 0.0, %v355
      %v357 = vpop.f32.mrf.mxu0
      %v358 = vadd.f32 0.0, %v357
      %359 = vdwg.mxu0
      %v360 = vmul.f32 %v321, 0.35355338
      %v361 = vmul.f32 %v323, 0.35355338
      %v362 = vmul.f32 %v326, 0.35355338
      %v363 = vmul.f32 %v328, 0.35355338
      %v364 = vmul.f32 %v331, 0.35355338
      %v365 = vmul.f32 %v333, 0.35355338
      %v366 = vmul.f32 %v336, 0.35355338
      %v367 = vmul.f32 %v338, 0.35355338
      %v368 = vmul.f32 %v341, 0.35355338
      %v369 = vmul.f32 %v343, 0.35355338
      %v370 = vmul.f32 %v346, 0.35355338
      %v371 = vmul.f32 %v348, 0.35355338
      %v372 = vmul.f32 %v351, 0.35355338
      %v373 = vmul.f32 %v353, 0.35355338
      %v374 = vmul.f32 %v356, 0.35355338
      %v375 = vmul.f32 %v358, 0.35355338
      %v376 = vmax.f32 %v360, -5.0
      %v377 = vmax.f32 %v361, -5.0
      %v378 = vmax.f32 %v362, -5.0
      %v379 = vmax.f32 %v363, -5.0
      %v380 = vmax.f32 %v364, -5.0
      %v381 = vmax.f32 %v365, -5.0
      %v382 = vmax.f32 %v366, -5.0
      %v383 = vmax.f32 %v367, -5.0
      %v384 = vmax.f32 %v368, -5.0
      %v385 = vmax.f32 %v369, -5.0
      %v386 = vmax.f32 %v370, -5.0
      %v387 = vmax.f32 %v371, -5.0
      %v388 = vmax.f32 %v372, -5.0
      %v389 = vmax.f32 %v373, -5.0
      %v390 = vmax.f32 %v374, -5.0
      %v391 = vmax.f32 %v375, -5.0
      %v392 = vmin.f32 %v376, 5.0
      %v393 = vmin.f32 %v377, 5.0
      %v394 = vmin.f32 %v378, 5.0
      %v395 = vmin.f32 %v379, 5.0
      %v396 = vmin.f32 %v380, 5.0
      %v397 = vmin.f32 %v381, 5.0
      %v398 = vmin.f32 %v382, 5.0
      %v399 = vmin.f32 %v383, 5.0
      %v400 = vmin.f32 %v384, 5.0
      %v401 = vmin.f32 %v385, 5.0
      %v402 = vmin.f32 %v386, 5.0
      %v403 = vmin.f32 %v387, 5.0
      %v404 = vmin.f32 %v388, 5.0
      %v405 = vmin.f32 %v389, 5.0
      %v406 = vmin.f32 %v390, 5.0
      %v407 = vmin.f32 %v391, 5.0
      %vm408 = vnez %v211
      %vm409 = vnez %v212
      %vm410 = vnez %v213
      %vm411 = vnez %v214
      %v412 = vmul.f32 %v392, 1.442695
      %v413 = vpow.pop %v412
      %v414 = vmul.f32 %v393, 1.442695
      %v415 = vpow.pop %v414
      %v416 = vmul.f32 %v394, 1.442695
      %v417 = vpow.pop %v416
      %v418 = vmul.f32 %v395, 1.442695
      %v419 = vpow.pop %v418
      %v420 = vmul.f32 %v396, 1.442695
      %v421 = vpow.pop %v420
      %v422 = vmul.f32 %v397, 1.442695
      %v423 = vpow.pop %v422
      %v424 = vmul.f32 %v398, 1.442695
      %v425 = vpow.pop %v424
      %v426 = vmul.f32 %v399, 1.442695
      %v427 = vpow.pop %v426
      %v428 = vmul.f32 %v400, 1.442695
      %v429 = vpow.pop %v428
      %v430 = vmul.f32 %v401, 1.442695
      %v431 = vpow.pop %v430
      %v432 = vmul.f32 %v402, 1.442695
      %v433 = vpow.pop %v432
      %v434 = vmul.f32 %v403, 1.442695
      %v435 = vpow.pop %v434
      %v436 = vmul.f32 %v404, 1.442695
      %v437 = vpow.pop %v436
      %v438 = vmul.f32 %v405, 1.442695
      %v439 = vpow.pop %v438
      %v440 = vmul.f32 %v406, 1.442695
      %v441 = vpow.pop %v440
      %v442 = vmul.f32 %v407, 1.442695
      %v443 = vpow.pop %v442
      %v444 = vsel %vm408, 16843009, 0
      %v445 = vsel %vm409, 16843009, 0
      %v446 = vsel %vm410, 16843009, 0
      %v447 = vsel %vm411, 16843009, 0
      %v448 = vunpack.c.0.s8 %v444
      %v449 = vunpack.c.1.s8 %v444
      %v450 = vunpack.c.2.s8 %v444
      %v451 = vunpack.c.3.s8 %v444
      %v452 = vunpack.c.0.s8 %v445
      %v453 = vunpack.c.1.s8 %v445
      %v454 = vunpack.c.2.s8 %v445
      %v455 = vunpack.c.3.s8 %v445
      %v456 = vunpack.c.0.s8 %v446
      %v457 = vunpack.c.1.s8 %v446
      %v458 = vunpack.c.2.s8 %v446
      %v459 = vunpack.c.3.s8 %v446
      %v460 = vunpack.c.0.s8 %v447
      %v461 = vunpack.c.1.s8 %v447
      %v462 = vunpack.c.2.s8 %v447
      %v463 = vunpack.c.3.s8 %v447
      %v464 = vpack.c.b16 %v448, %v448
      %v465 = vpack.c.b8 %v464, %v464
      %v466 = vpack.c.b16 %v449, %v449
      %v467 = vpack.c.b8 %v466, %v466
      %v468 = vpack.c.b16 %v450, %v450
      %v469 = vpack.c.b8 %v468, %v468
      %v470 = vpack.c.b16 %v451, %v451
      %v471 = vpack.c.b8 %v470, %v470
      %v472 = vpack.c.b16 %v452, %v452
      %v473 = vpack.c.b8 %v472, %v472
      %v474 = vpack.c.b16 %v453, %v453
      %v475 = vpack.c.b8 %v474, %v474
      %v476 = vpack.c.b16 %v454, %v454
      %v477 = vpack.c.b8 %v476, %v476
      %v478 = vpack.c.b16 %v455, %v455
      %v479 = vpack.c.b8 %v478, %v478
      %v480 = vpack.c.b16 %v456, %v456
      %v481 = vpack.c.b8 %v480, %v480
      %v482 = vpack.c.b16 %v457, %v457
      %v483 = vpack.c.b8 %v482, %v482
      %v484 = vpack.c.b16 %v458, %v458
      %v485 = vpack.c.b8 %v484, %v484
      %v486 = vpack.c.b16 %v459, %v459
      %v487 = vpack.c.b8 %v486, %v486
      %v488 = vpack.c.b16 %v460, %v460
      %v489 = vpack.c.b8 %v488, %v488
      %v490 = vpack.c.b16 %v461, %v461
      %v491 = vpack.c.b8 %v490, %v490
      %v492 = vpack.c.b16 %v462, %v462
      %v493 = vpack.c.b8 %v492, %v492
      %v494 = vpack.c.b16 %v463, %v463
      %v495 = vpack.c.b8 %v494, %v494
      %vm496 = vnez %v465
      %vm497 = vnez %v467
      %vm498 = vnez %v469
      %vm499 = vnez %v471
      %vm500 = vnez %v473
      %vm501 = vnez %v475
      %vm502 = vnez %v477
      %vm503 = vnez %v479
      %vm504 = vnez %v481
      %vm505 = vnez %v483
      %vm506 = vnez %v485
      %vm507 = vnez %v487
      %vm508 = vnez %v489
      %vm509 = vnez %v491
      %vm510 = vnez %v493
      %vm511 = vnez %v495
      %v512 = vsel %vm496, 16843009, 0
      %v513 = vsel %vm497, 16843009, 0
      %v514 = vsel %vm498, 16843009, 0
      %v515 = vsel %vm499, 16843009, 0
      %v516 = vsel %vm500, 16843009, 0
      %v517 = vsel %vm501, 16843009, 0
      %v518 = vsel %vm502, 16843009, 0
      %v519 = vsel %vm503, 16843009, 0
      %v520 = vsel %vm504, 16843009, 0
      %v521 = vsel %vm505, 16843009, 0
      %v522 = vsel %vm506, 16843009, 0
      %v523 = vsel %vm507, 16843009, 0
      %v524 = vsel %vm508, 16843009, 0
      %v525 = vsel %vm509, 16843009, 0
      %v526 = vsel %vm510, 16843009, 0
      %v527 = vsel %vm511, 16843009, 0
      %v528 = vunpack.c.0.s8 %v512
      %v529 = vunpack.c.0.s8 %v513
      %v530 = vunpack.c.0.s8 %v514
      %v531 = vunpack.c.0.s8 %v515
      %v532 = vunpack.c.0.s8 %v516
      %v533 = vunpack.c.0.s8 %v517
      %v534 = vunpack.c.0.s8 %v518
      %v535 = vunpack.c.0.s8 %v519
      %v536 = vunpack.c.0.s8 %v520
      %v537 = vunpack.c.0.s8 %v521
      %v538 = vunpack.c.0.s8 %v522
      %v539 = vunpack.c.0.s8 %v523
      %v540 = vunpack.c.0.s8 %v524
      %v541 = vunpack.c.0.s8 %v525
      %v542 = vunpack.c.0.s8 %v526
      %v543 = vunpack.c.0.s8 %v527
      %vm544 = vcmp.ne.s32.totalorder %v528, 0
      %vm545 = vcmp.ne.s32.totalorder %v529, 0
      %vm546 = vcmp.ne.s32.totalorder %v530, 0
      %vm547 = vcmp.ne.s32.totalorder %v531, 0
      %vm548 = vcmp.ne.s32.totalorder %v532, 0
      %vm549 = vcmp.ne.s32.totalorder %v533, 0
      %vm550 = vcmp.ne.s32.totalorder %v534, 0
      %vm551 = vcmp.ne.s32.totalorder %v535, 0
      %vm552 = vcmp.ne.s32.totalorder %v536, 0
      %vm553 = vcmp.ne.s32.totalorder %v537, 0
      %vm554 = vcmp.ne.s32.totalorder %v538, 0
      %vm555 = vcmp.ne.s32.totalorder %v539, 0
      %vm556 = vcmp.ne.s32.totalorder %v540, 0
      %vm557 = vcmp.ne.s32.totalorder %v541, 0
      %vm558 = vcmp.ne.s32.totalorder %v542, 0
      %vm559 = vcmp.ne.s32.totalorder %v543, 0
      %v560 = vsel %vm544, %v413, 0.0
      %v561 = vsel %vm545, %v415, 0.0
      %v562 = vsel %vm546, %v417, 0.0
      %v563 = vsel %vm547, %v419, 0.0
      %v564 = vsel %vm548, %v421, 0.0
      %v565 = vsel %vm549, %v423, 0.0
      %v566 = vsel %vm550, %v425, 0.0
      %v567 = vsel %vm551, %v427, 0.0
      %v568 = vsel %vm552, %v429, 0.0
      %v569 = vsel %vm553, %v431, 0.0
      %v570 = vsel %vm554, %v433, 0.0
      %v571 = vsel %vm555, %v435, 0.0
      %v572 = vsel %vm556, %v437, 0.0
      %v573 = vsel %vm557, %v439, 0.0
      %v574 = vsel %vm558, %v441, 0.0
      %v575 = vsel %vm559, %v443, 0.0
      %v576 = vld [vmem:[#allocation3] sm:$0xff]
      %v577 = vld [vmem:[#allocation3 + $0x8] sm:$0xff]
      %v578 = vld [vmem:[#allocation3 + $0x10] sm:$0xff]
      %v579 = vld [vmem:[#allocation3 + $0x18] sm:$0xff]
      %v580 = vld [vmem:[#allocation3 + $0x20] sm:$0xff]
      %v581 = vld [vmem:[#allocation3 + $0x28] sm:$0xff]
      %v582 = vld [vmem:[#allocation3 + $0x30] sm:$0xff]
      %v583 = vld [vmem:[#allocation3 + $0x38] sm:$0xff]
      %v584 = vld [vmem:[#allocation3 + $0x40] sm:$0xff]
      %v585 = vld [vmem:[#allocation3 + $0x48] sm:$0xff]
      %v586 = vld [vmem:[#allocation3 + $0x50] sm:$0xff]
      %v587 = vld [vmem:[#allocation3 + $0x58] sm:$0xff]
      %v588 = vld [vmem:[#allocation3 + $0x60] sm:$0xff]
      %v589 = vld [vmem:[#allocation3 + $0x68] sm:$0xff]
      %v590 = vld [vmem:[#allocation3 + $0x70] sm:$0xff]
      %v591 = vld [vmem:[#allocation3 + $0x78] sm:$0xff]
      %592 = vadd.xlane.f32.xlu0 %v560
      %v593 = vpop.xlane.xlu0 %592
      %594 = vadd.xlane.f32.xlu0 %v561
      %v595 = vpop.xlane.xlu0 %594
      %596 = vadd.xlane.f32.xlu0 %v562
      %v597 = vpop.xlane.xlu0 %596
      %598 = vadd.xlane.f32.xlu0 %v563
      %v599 = vpop.xlane.xlu0 %598
      %600 = vadd.xlane.f32.xlu0 %v564
      %v601 = vpop.xlane.xlu0 %600
      %602 = vadd.xlane.f32.xlu0 %v565
      %v603 = vpop.xlane.xlu0 %602
      %604 = vadd.xlane.f32.xlu0 %v566
      %v605 = vpop.xlane.xlu0 %604
      %606 = vadd.xlane.f32.xlu0 %v567
      %v607 = vpop.xlane.xlu0 %606
      %608 = vadd.xlane.f32.xlu0 %v568
      %v609 = vpop.xlane.xlu0 %608
      %610 = vadd.xlane.f32.xlu0 %v569
      %v611 = vpop.xlane.xlu0 %610
      %612 = vadd.xlane.f32.xlu0 %v570
      %v613 = vpop.xlane.xlu0 %612
      %614 = vadd.xlane.f32.xlu0 %v571
      %v615 = vpop.xlane.xlu0 %614
      %616 = vadd.xlane.f32.xlu0 %v572
      %v617 = vpop.xlane.xlu0 %616
      %618 = vadd.xlane.f32.xlu0 %v573
      %v619 = vpop.xlane.xlu0 %618
      %620 = vadd.xlane.f32.xlu0 %v574
      %v621 = vpop.xlane.xlu0 %620
      %622 = vadd.xlane.f32.xlu0 %v575
      %v623 = vpop.xlane.xlu0 %622
      %v624 = vadd.f32 %v576, %v593
      %v625 = vadd.f32 %v577, %v595
      %v626 = vadd.f32 %v578, %v597
      %v627 = vadd.f32 %v579, %v599
      %v628 = vadd.f32 %v580, %v601
      %v629 = vadd.f32 %v581, %v603
      %v630 = vadd.f32 %v582, %v605
      %v631 = vadd.f32 %v583, %v607
      %v632 = vadd.f32 %v584, %v609
      %v633 = vadd.f32 %v585, %v611
      %v634 = vadd.f32 %v586, %v613
      %v635 = vadd.f32 %v587, %v615
      %v636 = vadd.f32 %v588, %v617
      %v637 = vadd.f32 %v589, %v619
      %v638 = vadd.f32 %v590, %v621
      %v639 = vadd.f32 %v591, %v623
      %vm640 = vcmask 7168
      %641 = vst.msk [vmem:[#allocation3] sm:$0xff] %vm640, %v624
      %642 = vst.msk [vmem:[#allocation3 + $0x8] sm:$0xff] %vm640, %v625
      %643 = vst.msk [vmem:[#allocation3 + $0x10] sm:$0xff] %vm640, %v626
      %644 = vst.msk [vmem:[#allocation3 + $0x18] sm:$0xff] %vm640, %v627
      %645 = vst.msk [vmem:[#allocation3 + $0x20] sm:$0xff] %vm640, %v628
      %646 = vst.msk [vmem:[#allocation3 + $0x28] sm:$0xff] %vm640, %v629
      %647 = vst.msk [vmem:[#allocation3 + $0x30] sm:$0xff] %vm640, %v630
      %648 = vst.msk [vmem:[#allocation3 + $0x38] sm:$0xff] %vm640, %v631
      %649 = vst.msk [vmem:[#allocation3 + $0x40] sm:$0xff] %vm640, %v632
      %650 = vst.msk [vmem:[#allocation3 + $0x48] sm:$0xff] %vm640, %v633
      %651 = vst.msk [vmem:[#allocation3 + $0x50] sm:$0xff] %vm640, %v634
      %652 = vst.msk [vmem:[#allocation3 + $0x58] sm:$0xff] %vm640, %v635
      %653 = vst.msk [vmem:[#allocation3 + $0x60] sm:$0xff] %vm640, %v636
      %654 = vst.msk [vmem:[#allocation3 + $0x68] sm:$0xff] %vm640, %v637
      %655 = vst.msk [vmem:[#allocation3 + $0x70] sm:$0xff] %vm640, %v638
      %656 = vst.msk [vmem:[#allocation3 + $0x78] sm:$0xff] %vm640, %v639
      %v657 = vld [vmem:[#allocation2] sm:$0xff]
      %v658 = vld [vmem:[#allocation2 + $0x8] sm:$0xff]
      %v659 = vld [vmem:[#allocation2 + $0x10] sm:$0xff]
      %v660 = vld [vmem:[#allocation2 + $0x18] sm:$0xff]
      %v661 = vld [vmem:[#allocation2 + $0x20] sm:$0xff]
      %v662 = vld [vmem:[#allocation2 + $0x28] sm:$0xff]
      %v663 = vld [vmem:[#allocation2 + $0x30] sm:$0xff]
      %v664 = vld [vmem:[#allocation2 + $0x38] sm:$0xff]
      %v665 = vld [vmem:[#allocation2 + $0x40] sm:$0xff]
      %v666 = vld [vmem:[#allocation2 + $0x48] sm:$0xff]
      %v667 = vld [vmem:[#allocation2 + $0x50] sm:$0xff]
      %v668 = vld [vmem:[#allocation2 + $0x58] sm:$0xff]
      %v669 = vld [vmem:[#allocation2 + $0x60] sm:$0xff]
      %v670 = vld [vmem:[#allocation2 + $0x68] sm:$0xff]
      %v671 = vld [vmem:[#allocation2 + $0x70] sm:$0xff]
      %v672 = vld [vmem:[#allocation2 + $0x78] sm:$0xff]
      %v673 = vpack.c.bf16 %v561, %v560
      %v674 = vpack.c.bf16 %v563, %v562
      %v675 = vpack.c.bf16 %v565, %v564
      %v676 = vpack.c.bf16 %v567, %v566
      %v677 = vpack.c.bf16 %v569, %v568
      %v678 = vpack.c.bf16 %v571, %v570
      %v679 = vpack.c.bf16 %v573, %v572
      %v680 = vpack.c.bf16 %v575, %v574
      %v697 = vunpack.c.l.b16 %v195
      %v698 = vunpack.c.l.b16 %v196
      %v699 = vunpack.c.l.b16 %v197
      %v700 = vunpack.c.l.b16 %v198
      %v701 = vunpack.c.l.b16 %v199
      %v702 = vunpack.c.l.b16 %v200
      %v703 = vunpack.c.l.b16 %v201
      %v704 = vunpack.c.l.b16 %v202
      %v705 = vunpack.c.l.b16 %v203
      %v706 = vunpack.c.l.b16 %v204
      %v707 = vunpack.c.l.b16 %v205
      %v708 = vunpack.c.l.b16 %v206
      %v709 = vunpack.c.l.b16 %v207
      %v710 = vunpack.c.l.b16 %v208
      %v711 = vunpack.c.l.b16 %v209
      %v712 = vunpack.c.l.b16 %v210
      %v713 = vpack.c.b16 %v698, %v697
      %v714 = vpack.c.b16 %v700, %v699
      %v715 = vpack.c.b16 %v702, %v701
      %v716 = vpack.c.b16 %v704, %v703
      %v717 = vpack.c.b16 %v706, %v705
      %v718 = vpack.c.b16 %v708, %v707
      %v719 = vpack.c.b16 %v710, %v709
      %v720 = vpack.c.b16 %v712, %v711
      %729 = vmatpush.bf16.msra.mxu0 %v720
      %730 = vmatpush.bf16.msra.mxu0 %v719
      %731 = vmatpush.bf16.msra.mxu0 %v718
      %732 = vmatpush.bf16.msra.mxu0 %v717
      %733 = vmatpush.bf16.msra.mxu0 %v716
      %734 = vmatpush.bf16.msra.mxu0 %v715
      %735 = vmatpush.bf16.msra.mxu0 %v714
      %736 = vmatpush.bf16.msra.mxu0 %v713
      %737 = vmatmul.bf16.gmra.mxu0 %v673
      %v738 = vpop.f32.mrf.mxu0
      %v739 = vadd.f32 0.0, %v738
      %v740 = vpop.f32.mrf.mxu0
      %v741 = vadd.f32 0.0, %v740
      %742 = vmatmul.bf16.gmra.mxu0 %v674
      %v743 = vpop.f32.mrf.mxu0
      %v744 = vadd.f32 0.0, %v743
      %v745 = vpop.f32.mrf.mxu0
      %v746 = vadd.f32 0.0, %v745
      %747 = vmatmul.bf16.gmra.mxu0 %v675
      %v748 = vpop.f32.mrf.mxu0
      %v749 = vadd.f32 0.0, %v748
      %v750 = vpop.f32.mrf.mxu0
      %v751 = vadd.f32 0.0, %v750
      %752 = vmatmul.bf16.gmra.mxu0 %v676
      %v753 = vpop.f32.mrf.mxu0
      %v754 = vadd.f32 0.0, %v753
      %v755 = vpop.f32.mrf.mxu0
      %v756 = vadd.f32 0.0, %v755
      %757 = vmatmul.bf16.gmra.mxu0 %v677
      %v758 = vpop.f32.mrf.mxu0
      %v759 = vadd.f32 0.0, %v758
      %v760 = vpop.f32.mrf.mxu0
      %v761 = vadd.f32 0.0, %v760
      %762 = vmatmul.bf16.gmra.mxu0 %v678
      %v763 = vpop.f32.mrf.mxu0
      %v764 = vadd.f32 0.0, %v763
      %v765 = vpop.f32.mrf.mxu0
      %v766 = vadd.f32 0.0, %v765
      %767 = vmatmul.bf16.gmra.mxu0 %v679
      %v768 = vpop.f32.mrf.mxu0
      %v769 = vadd.f32 0.0, %v768
      %v770 = vpop.f32.mrf.mxu0
      %v771 = vadd.f32 0.0, %v770
      %772 = vmatmul.bf16.gmra.mxu0 %v680
      %v773 = vpop.f32.mrf.mxu0
      %v774 = vadd.f32 0.0, %v773
      %v775 = vpop.f32.mrf.mxu0
      %v776 = vadd.f32 0.0, %v775
      %777 = vdwg.mxu0
      %v778 = vadd.f32 %v657, %v739
      %v779 = vadd.f32 %v658, %v741
      %v780 = vadd.f32 %v659, %v744
      %v781 = vadd.f32 %v660, %v746
      %v782 = vadd.f32 %v661, %v749
      %v783 = vadd.f32 %v662, %v751
      %v784 = vadd.f32 %v663, %v754
      %v785 = vadd.f32 %v664, %v756
      %v786 = vadd.f32 %v665, %v759
      %v787 = vadd.f32 %v666, %v761
      %v788 = vadd.f32 %v667, %v764
      %v789 = vadd.f32 %v668, %v766
      %v790 = vadd.f32 %v669, %v769
      %v791 = vadd.f32 %v670, %v771
      %v792 = vadd.f32 %v671, %v774
      %v793 = vadd.f32 %v672, %v776
      %794 = vst [vmem:[#allocation2] sm:$0xff] %v778
      %795 = vst [vmem:[#allocation2 + $0x8] sm:$0xff] %v779
      %796 = vst [vmem:[#allocation2 + $0x10] sm:$0xff] %v780
      %797 = vst [vmem:[#allocation2 + $0x18] sm:$0xff] %v781
      %798 = vst [vmem:[#allocation2 + $0x20] sm:$0xff] %v782
      %799 = vst [vmem:[#allocation2 + $0x28] sm:$0xff] %v783
      %800 = vst [vmem:[#allocation2 + $0x30] sm:$0xff] %v784
      %801 = vst [vmem:[#allocation2 + $0x38] sm:$0xff] %v785
      %802 = vst [vmem:[#allocation2 + $0x40] sm:$0xff] %v786
      %803 = vst [vmem:[#allocation2 + $0x48] sm:$0xff] %v787
      %804 = vst [vmem:[#allocation2 + $0x50] sm:$0xff] %v788
      %805 = vst [vmem:[#allocation2 + $0x58] sm:$0xff] %v789
      %806 = vst [vmem:[#allocation2 + $0x60] sm:$0xff] %v790
      %807 = vst [vmem:[#allocation2 + $0x68] sm:$0xff] %v791
      %808 = vst [vmem:[#allocation2 + $0x70] sm:$0xff] %v792
      %809 = vst [vmem:[#allocation2 + $0x78] sm:$0xff] %v793
    $region41: #{tpu_custom_call.1} parent=1 // pred_fallthru
      _
    // Predicated region
    $region42: #{tpu_custom_call.1} parent=1 // pred_check
      %p810 = pneg %p121
    $region43: #{tpu_custom_call.1} parent=1 // pred_check_branch
      %812 = sbr.rel (%p810) target = $region45
    $region44: #{tpu_custom_call.1} parent=1 // pred_region
      %v813 = vld [vmem:[#allocation2] sm:$0xff]
      %v814 = vld [vmem:[#allocation2 + $0x8] sm:$0xff]
      %v815 = vld [vmem:[#allocation2 + $0x10] sm:$0xff]
      %v816 = vld [vmem:[#allocation2 + $0x18] sm:$0xff]
      %v817 = vld [vmem:[#allocation2 + $0x20] sm:$0xff]
      %v818 = vld [vmem:[#allocation2 + $0x28] sm:$0xff]
      %v819 = vld [vmem:[#allocation2 + $0x30] sm:$0xff]
      %v820 = vld [vmem:[#allocation2 + $0x38] sm:$0xff]
      %v821 = vld [vmem:[#allocation2 + $0x40] sm:$0xff]
      %v822 = vld [vmem:[#allocation2 + $0x48] sm:$0xff]
      %v823 = vld [vmem:[#allocation2 + $0x50] sm:$0xff]
      %v824 = vld [vmem:[#allocation2 + $0x58] sm:$0xff]
      %v825 = vld [vmem:[#allocation2 + $0x60] sm:$0xff]
      %v826 = vld [vmem:[#allocation2 + $0x68] sm:$0xff]
      %v827 = vld [vmem:[#allocation2 + $0x70] sm:$0xff]
      %v828 = vld [vmem:[#allocation2 + $0x78] sm:$0xff]
      %v829 = vld [vmem:[#allocation3] sm:$0xff]
      %v830 = vld [vmem:[#allocation3 + $0x8] sm:$0xff]
      %v831 = vld [vmem:[#allocation3 + $0x10] sm:$0xff]
      %v832 = vld [vmem:[#allocation3 + $0x18] sm:$0xff]
      %v833 = vld [vmem:[#allocation3 + $0x20] sm:$0xff]
      %v834 = vld [vmem:[#allocation3 + $0x28] sm:$0xff]
      %v835 = vld [vmem:[#allocation3 + $0x30] sm:$0xff]
      %v836 = vld [vmem:[#allocation3 + $0x38] sm:$0xff]
      %v837 = vld [vmem:[#allocation3 + $0x40] sm:$0xff]
      %v838 = vld [vmem:[#allocation3 + $0x48] sm:$0xff]
      %v839 = vld [vmem:[#allocation3 + $0x50] sm:$0xff]
      %v840 = vld [vmem:[#allocation3 + $0x58] sm:$0xff]
      %v841 = vld [vmem:[#allocation3 + $0x60] sm:$0xff]
      %v842 = vld [vmem:[#allocation3 + $0x68] sm:$0xff]
      %v843 = vld [vmem:[#allocation3 + $0x70] sm:$0xff]
      %v844 = vld [vmem:[#allocation3 + $0x78] sm:$0xff]
      %v845 = vrcp.pop %v829
      %v846 = vrcp.pop %v830
      %v847 = vrcp.pop %v831
      %v848 = vrcp.pop %v832
      %v849 = vrcp.pop %v833
      %v850 = vrcp.pop %v834
      %v851 = vrcp.pop %v835
      %v852 = vrcp.pop %v836
      %v853 = vrcp.pop %v837
      %v854 = vrcp.pop %v838
      %v855 = vrcp.pop %v839
      %v856 = vrcp.pop %v840
      %v857 = vrcp.pop %v841
      %v858 = vrcp.pop %v842
      %v859 = vrcp.pop %v843
      %v860 = vrcp.pop %v844
      %862 = vset.pattern.permute.xlu0 0
      %863 = vperm.xlu0 %862, %v845
      %v864 = vpop.permute.xlu0 %863
      %867 = vset.pattern.permute.xlu0 0
      %868 = vperm.xlu0 %867, %v846
      %v869 = vpop.permute.xlu0 %868
      %872 = vset.pattern.permute.xlu0 0
      %873 = vperm.xlu0 %872, %v847
      %v874 = vpop.permute.xlu0 %873
      %877 = vset.pattern.permute.xlu0 0
      %878 = vperm.xlu0 %877, %v848
      %v879 = vpop.permute.xlu0 %878
      %882 = vset.pattern.permute.xlu0 0
      %883 = vperm.xlu0 %882, %v849
      %v884 = vpop.permute.xlu0 %883
      %887 = vset.pattern.permute.xlu0 0
      %888 = vperm.xlu0 %887, %v850
      %v889 = vpop.permute.xlu0 %888
      %892 = vset.pattern.permute.xlu0 0
      %893 = vperm.xlu0 %892, %v851
      %v894 = vpop.permute.xlu0 %893
      %897 = vset.pattern.permute.xlu0 0
      %898 = vperm.xlu0 %897, %v852
      %v899 = vpop.permute.xlu0 %898
      %902 = vset.pattern.permute.xlu0 0
      %903 = vperm.xlu0 %902, %v853
      %v904 = vpop.permute.xlu0 %903
      %907 = vset.pattern.permute.xlu0 0
      %908 = vperm.xlu0 %907, %v854
      %v909 = vpop.permute.xlu0 %908
      %912 = vset.pattern.permute.xlu0 0
      %913 = vperm.xlu0 %912, %v855
      %v914 = vpop.permute.xlu0 %913
      %917 = vset.pattern.permute.xlu0 0
      %918 = vperm.xlu0 %917, %v856
      %v919 = vpop.permute.xlu0 %918
      %922 = vset.pattern.permute.xlu0 0
      %923 = vperm.xlu0 %922, %v857
      %v924 = vpop.permute.xlu0 %923
      %927 = vset.pattern.permute.xlu0 0
      %928 = vperm.xlu0 %927, %v858
      %v929 = vpop.permute.xlu0 %928
      %932 = vset.pattern.permute.xlu0 0
      %933 = vperm.xlu0 %932, %v859
      %v934 = vpop.permute.xlu0 %933
      %937 = vset.pattern.permute.xlu0 0
      %938 = vperm.xlu0 %937, %v860
      %v939 = vpop.permute.xlu0 %938
      %v941 = vmul.f32 %v813, %v864
      %v942 = vmul.f32 %v814, %v869
      %v943 = vmul.f32 %v815, %v874
      %v944 = vmul.f32 %v816, %v879
      %v945 = vmul.f32 %v817, %v884
      %v946 = vmul.f32 %v818, %v889
      %v947 = vmul.f32 %v819, %v894
      %v948 = vmul.f32 %v820, %v899
      %v949 = vmul.f32 %v821, %v904
      %v950 = vmul.f32 %v822, %v909
      %v951 = vmul.f32 %v823, %v914
      %v952 = vmul.f32 %v824, %v919
      %v953 = vmul.f32 %v825, %v924
      %v954 = vmul.f32 %v826, %v929
      %v955 = vmul.f32 %v827, %v934
      %v956 = vmul.f32 %v828, %v939
      %v957 = vpack.c.bf16 %v941, %v941
      %v958 = vpack.c.bf16 %v942, %v942
      %v959 = vpack.c.bf16 %v943, %v943
      %v960 = vpack.c.bf16 %v944, %v944
      %v961 = vpack.c.bf16 %v945, %v945
      %v962 = vpack.c.bf16 %v946, %v946
      %v963 = vpack.c.bf16 %v947, %v947
      %v964 = vpack.c.bf16 %v948, %v948
      %v965 = vpack.c.bf16 %v949, %v949
      %v966 = vpack.c.bf16 %v950, %v950
      %v967 = vpack.c.bf16 %v951, %v951
      %v968 = vpack.c.bf16 %v952, %v952
      %v969 = vpack.c.bf16 %v953, %v953
      %v970 = vpack.c.bf16 %v954, %v954
      %v971 = vpack.c.bf16 %v955, %v955
      %v972 = vpack.c.bf16 %v956, %v956
      %973 = vst [vmem:[#allocation15] sm:$0xf] %v957
      %974 = vst [vmem:[#allocation15 + $0x4] sm:$0xf] %v958
      %975 = vst [vmem:[#allocation15 + $0x8] sm:$0xf] %v959
      %976 = vst [vmem:[#allocation15 + $0xc] sm:$0xf] %v960
      %977 = vst [vmem:[#allocation15 + $0x10] sm:$0xf] %v961
      %978 = vst [vmem:[#allocation15 + $0x14] sm:$0xf] %v962
      %979 = vst [vmem:[#allocation15 + $0x18] sm:$0xf] %v963
      %980 = vst [vmem:[#allocation15 + $0x1c] sm:$0xf] %v964
      %981 = vst [vmem:[#allocation15 + $0x20] sm:$0xf] %v965
      %982 = vst [vmem:[#allocation15 + $0x24] sm:$0xf] %v966
      %983 = vst [vmem:[#allocation15 + $0x28] sm:$0xf] %v967
      %984 = vst [vmem:[#allocation15 + $0x2c] sm:$0xf] %v968
      %985 = vst [vmem:[#allocation15 + $0x30] sm:$0xf] %v969
      %986 = vst [vmem:[#allocation15 + $0x34] sm:$0xf] %v970
      %987 = vst [vmem:[#allocation15 + $0x38] sm:$0xf] %v971
      %988 = vst [vmem:[#allocation15 + $0x3c] sm:$0xf] %v972
    $region45: #{tpu_custom_call.1} parent=1 // pred_fallthru
      _
    // Predicated region
    $region46: #{tpu_custom_call.1} parent=1 // pred_check
      _
    $region47: #{tpu_custom_call.1} parent=1 // pred_check_branch
      %990 = sbr.rel (0) target = $region49
    $region48: #{tpu_custom_call.1} parent=1 // pred_region
      %992 = vsyncadd [#allocation9], 0
      %s993 = sshll.u32 [#allocation15], 4
      %s994 = int_to_ptr.vmem [resolvable:$true] %s993
      %s995 = sshll.u32 %s6, 4
      %s996 = int_to_ptr.hbm [resolvable:$true] %s995
      %1001 = dma.vmem_to_hbm [thread:$0]  %s994, 1024, %s996, [#allocation9], 64, 64, 4
    $region49: #{tpu_custom_call.1} parent=1 // pred_fallthru
      _
    // Predicated region
    $region50: #{tpu_custom_call.1} parent=1 // pred_check
      _
    $region51: #{tpu_custom_call.1} parent=1 // pred_check_branch
      %1003 = sbr.rel (0) target = $region53
    $region52: #{tpu_custom_call.1} parent=1 // pred_region
      %1005 = dma.done [#allocation9], 1024
    $region53: #{tpu_custom_call.1} parent=1 // pred_fallthru
      _
    %1006 = vsyncpa [#allocation8], 1
    %1007 = vsyncpa [#allocation11], 1
    %1008 = vsyncpa [#allocation14], 1
    %1009 = vsyncpa [#allocation9], 1

</llo_original>
